<compile_context>
chip_gen: v5e
topology: v5e:2x2
jax: 0.10.0
libtpu: 0.0.40
codegen_flags: <defaults>
</compile_context>

<pallas_src>
import jax
import jax.numpy as jnp
from jax.experimental import pallas as pl
from jax.experimental.pallas import tpu as pltpu

HW = 1024        # Linear(1024, 10) after a 1-channel feature map => H = W = 32
OUT_PAD = 128    # lane-dense padded output width (true width = 10)


def net_kernel(w1_ref, x_ref, fcw_ref, fcb_ref, o_ref):
    """One batch tile.

    w1_ref : (3,)              SMEM  conv1 channel weights (scalars, f32)
    x_ref  : (TILE_N, 3*HW)    VMEM  NCHW-flattened input tile (f32 or bf16)
    fcw_ref: (HW, OUT_PAD)     VMEM  fc1 weight^T, pre-scaled by max(conv2, 0), zero-padded
    fcb_ref: (1, OUT_PAD)      VMEM  fc1 bias, zero-padded (f32)
    o_ref  : (TILE_N, OUT_PAD) VMEM  output tile (f32)
    """
    # conv1: 1x1 conv, 3 -> 1 channel, no bias == weighted sum over the three
    # lane-aligned channel slabs (upcast to f32: v5e has no bf16 VPU), then ReLU.
    y = w1_ref[0] * x_ref[:, pl.ds(0 * HW, HW)].astype(jnp.float32)
    y = y + w1_ref[1] * x_ref[:, pl.ds(1 * HW, HW)].astype(jnp.float32)
    y = y + w1_ref[2] * x_ref[:, pl.ds(2 * HW, HW)].astype(jnp.float32)
    y = jnp.maximum(y, 0.0)

    # conv2 + its ReLU are folded into fcw_ref on the host (see prepare_params).

    # fc1 (Linear 1024 -> 10, padded to 128 lanes) + ReLU on the MXU.
    # LHS is cast to the weight dtype (bf16 weights => single-pass bf16 matmul),
    # accumulation stays f32.
    out = jnp.dot(y.astype(fcw_ref.dtype), fcw_ref[...],
                  preferred_element_type=jnp.float32) + fcb_ref[...]
    o_ref[...] = jnp.maximum(out, 0.0)


def prepare_params(conv1_w, conv2_w, fc1_w, fc1_b, *, weight_dtype=jnp.float32):
    """One-time host-side weight prep (hoisted out of the per-call forward path)."""
    n_out = fc1_w.shape[0]
    assert fc1_w.shape[1] == HW

    w1 = conv1_w.reshape(-1).astype(jnp.float32)                               # (3,)
    # TODO(synk): the PyTorch forward as written errors (conv2 is Conv2d(3,1,1) but is fed a
    # 1-channel tensor); we follow the runnable fix-up of using conv2's first input-channel
    # weight as a scalar gate on the 1-channel feature map.
    w2 = conv2_w.reshape(conv2_w.shape[0], -1)[0, 0].astype(jnp.float32)

    # Fold conv2 + its ReLU: relu(w2 * y) == max(w2, 0) * y for y >= 0, so scale fc1^T.
    fcw_t = jnp.transpose(fc1_w).astype(jnp.float32) * jnp.maximum(w2, 0.0)    # (HW, n_out)
    fcw_pad = (jnp.zeros((HW, OUT_PAD), jnp.float32)
               .at[:, :n_out].set(fcw_t)
               .astype(weight_dtype))
    # Bias stays f32: it is added to the f32 MXU accumulator.
    fcb_pad = jnp.zeros((1, OUT_PAD), jnp.float32).at[0, :n_out].set(fc1_b.astype(jnp.float32))
    return w1, fcw_pad, fcb_pad, n_out


def _round_up(x, m):
    return -(-x // m) * m


def _default_tile_and_vmem():
    """Per-generation defaults.

    v5e / v6e (128 MiB physical VMEM): tile_n = 1024, 64 MiB scoped limit.
    v7x (64 MiB per TC) and unknown devices: tile_n = 512, 48 MiB scoped limit.
    """
    try:
        info = pltpu.get_tpu_info()
        vmem = getattr(info, "vmem_capacity_bytes", 0) or 0
        if vmem >= 100 * 1024 * 1024:
            return 1024, 64 * 1024 * 1024
    except Exception:
        pass
    return 512, 48 * 1024 * 1024


def _pick_tile_n(N, tile_n):
    """Clamp the batch tile: <= N, 16-sublane aligned (covers f32 and bf16), and
    guaranteeing >= 2 grid steps for large batches so both v7x TensorCores get work."""
    tile_n = min(tile_n, N)
    if N >= 32:
        tile_n = min(tile_n, _round_up(pl.cdiv(N, 2), 16))
    if tile_n != N:
        tile_n = max(16, (tile_n // 16) * 16)
    return tile_n


def net_forward(x_nchw, params, *, tile_n=None, vmem_limit_bytes=None):
    """x_nchw: (N, 3, 32, 32) f32 or bf16 -> (N, 10) float32, matching Net.forward."""
    w1, fcw_pad, fcb_pad, n_out = params
    N, C, H, W = x_nchw.shape
    assert C == 3 and H * W == HW

    dflt_tile, dflt_vmem = _default_tile_and_vmem()
    if tile_n is None:
        tile_n = dflt_tile
    if vmem_limit_bytes is None:
        vmem_limit_bytes = dflt_vmem
    tile_n = _pick_tile_n(N, tile_n)
    grid = (pl.cdiv(N, tile_n),)

    # Free view: natural NCHW flattening; channel c occupies lanes [c*HW, (c+1)*HW).
    # Keep the caller's dtype (bf16 halves the binding HBM traffic); no forced upcast here.
    x_flat = x_nchw.reshape(N, C * HW)

    x_bytes = x_flat.dtype.itemsize
    w_bytes = fcw_pad.dtype.itemsize
    cost = pl.CostEstimate(
        # conv1: 3 mul + 2 add + relu per pixel (~6 flops); fc: padded 128-lane matmul.
        flops=2 * N * HW * OUT_PAD + 6 * N * HW,
        transcendentals=0,
        bytes_accessed=(N * C * HW * x_bytes          # input
                        + HW * OUT_PAD * w_bytes      # fc weight (resident)
                        + OUT_PAD * 4                 # bias
                        + N * OUT_PAD * 4),           # output
    )

    out_padded = pl.pallas_call(
        net_kernel,
        out_shape=jax.ShapeDtypeStruct((N, OUT_PAD), jnp.float32),
        grid=grid,
        in_specs=[
            pl.BlockSpec(memory_space=pltpu.MemorySpace.SMEM),        # conv1 weights (scalars)
            pl.BlockSpec((tile_n, C * HW), lambda i: (i, 0)),         # input batch tile
            pl.BlockSpec((HW, OUT_PAD), lambda i: (0, 0)),            # fc1 weight^T (resident)
            pl.BlockSpec((1, OUT_PAD), lambda i: (0, 0)),             # fc1 bias (resident)
        ],
        out_specs=pl.BlockSpec((tile_n, OUT_PAD), lambda i: (i, 0)),
        compiler_params=pltpu.CompilerParams(
            dimension_semantics=("parallel",),
            vmem_limit_bytes=vmem_limit_bytes,
        ),
        cost_estimate=cost,
    )(w1, x_flat, fcw_pad, fcb_pad)

    return out_padded[:, :n_out]


if __name__ == "__main__":
    key = jax.random.PRNGKey(0)
    k_x, k_c1, k_c2, k_fw, k_fb = jax.random.split(key, 5)

    # Linear(1024, 10) on the flattened 1-channel feature map implies H = W = 32.
    N, C, H, W = 4, 3, 32, 32
    x = jax.random.normal(k_x, (N, C, H, W), dtype=jnp.float32)

    # Deterministic parameter init (uniform, roughly PyTorch fan-in scaling).
    conv1_w = jax.random.uniform(k_c1, (1, 3, 1, 1), jnp.float32, -0.5, 0.5)
    conv2_w = jax.random.uniform(k_c2, (1, 3, 1, 1), jnp.float32, -0.5, 0.5)
    fc1_w = jax.random.uniform(k_fw, (10, 1024), jnp.float32, -1.0 / 32.0, 1.0 / 32.0)
    fc1_b = jax.random.uniform(k_fb, (10,), jnp.float32, -1.0 / 32.0, 1.0 / 32.0)

    # Pure-JAX reference of the same (fixed-up) semantics.
    def reference(x_f32):
        y = jnp.maximum(jnp.einsum("nchw,c->nhw", x_f32, conv1_w.reshape(3)), 0.0)
        y = jnp.maximum(conv2_w[0, 0, 0, 0] * y, 0.0)
        y = y.reshape(x_f32.shape[0], -1)
        return jnp.maximum(y @ fc1_w.T + fc1_b, 0.0)

    # --- f32 path (strict check) -------------------------------------------------
    params_f32 = prepare_params(conv1_w, conv2_w, fc1_w, fc1_b)   # one-time weight prep
    out = jax.block_until_ready(net_forward(x, params_f32))
    assert out.shape == (N, 10)
    assert jnp.allclose(out, reference(x), atol=1e-4, rtol=1e-4)

    # --- bf16 activations + bf16 fc weights (halves binding HBM traffic) ---------
    params_bf16 = prepare_params(conv1_w, conv2_w, fc1_w, fc1_b, weight_dtype=jnp.bfloat16)
    x_bf16 = x.astype(jnp.bfloat16)
    out_bf = jax.block_until_ready(net_forward(x_bf16, params_bf16))
    ref_bf = reference(x_bf16.astype(jnp.float32))
    assert out_bf.shape == (N, 10)
    assert jnp.allclose(out_bf, ref_bf, atol=5e-2, rtol=5e-2)

    print("KERNEL_OK")
</pallas_src>

<mosaic_0001>
module attributes {stable_mosaic.version = 11 : i64} {
  func.func @net_kernel(%arg0: i32, %arg1: memref<3xf32, #tpu.memory_space<smem>>, %arg2: memref<4x3072xf32, #tpu.memory_space<vmem>>, %arg3: memref<1024x128xf32, #tpu.memory_space<vmem>>, %arg4: memref<1x128xf32, #tpu.memory_space<vmem>>, %arg5: memref<4x128xf32, #tpu.memory_space<vmem>>) attributes {dimension_semantics = [#tpu.dimension_semantics<parallel>], iteration_bounds = array<i64: 1>, scalar_prefetch = 0 : i64, scratch_operands = 0 : i64, tpu.core_type = #tpu.core_type<tc>, window_params = [{transform_indices = @transform_0, window_bounds = array<i64: 3>}, {transform_indices = @transform_1, window_bounds = array<i64: 4, 3072>}, {pipeline_mode = #tpu.pipeline_mode<synchronous>, transform_indices = @transform_2, window_bounds = array<i64: 1024, 128>}, {pipeline_mode = #tpu.pipeline_mode<synchronous>, transform_indices = @transform_3, window_bounds = array<i64: 1, 128>}, {transform_indices = @transform_4, window_bounds = array<i64: 4, 128>}]} {
    %c0 = arith.constant 0 : index
    %0 = memref.load %arg1[%c0] : memref<3xf32, #tpu.memory_space<smem>>
    %c0_0 = arith.constant 0 : index
    %c0_1 = arith.constant 0 : index
    %1 = vector.load %arg2[%c0_0, %c0_1] : memref<4x3072xf32, #tpu.memory_space<vmem>>, vector<4x1024xf32>
    %2 = vector.broadcast %0 : f32 to vector<4x1024xf32>
    %3 = arith.mulf %2, %1 : vector<4x1024xf32>
    %c1 = arith.constant 1 : index
    %4 = memref.load %arg1[%c1] : memref<3xf32, #tpu.memory_space<smem>>
    %c0_2 = arith.constant 0 : index
    %c1024 = arith.constant 1024 : index
    %5 = vector.load %arg2[%c0_2, %c1024] : memref<4x3072xf32, #tpu.memory_space<vmem>>, vector<4x1024xf32>
    %6 = vector.broadcast %4 : f32 to vector<4x1024xf32>
    %7 = arith.mulf %6, %5 : vector<4x1024xf32>
    %8 = arith.addf %3, %7 : vector<4x1024xf32>
    %c2 = arith.constant 2 : index
    %9 = memref.load %arg1[%c2] : memref<3xf32, #tpu.memory_space<smem>>
    %c0_3 = arith.constant 0 : index
    %c2048 = arith.constant 2048 : index
    %10 = vector.load %arg2[%c0_3, %c2048] : memref<4x3072xf32, #tpu.memory_space<vmem>>, vector<4x1024xf32>
    %11 = vector.broadcast %9 : f32 to vector<4x1024xf32>
    %12 = arith.mulf %11, %10 : vector<4x1024xf32>
    %13 = arith.addf %8, %12 : vector<4x1024xf32>
    %cst = arith.constant 0.000000e+00 : f32
    %14 = vector.broadcast %cst : f32 to vector<4x1024xf32>
    %15 = arith.maximumf %13, %14 : vector<4x1024xf32>
    %c0_4 = arith.constant 0 : index
    %c0_5 = arith.constant 0 : index
    %16 = vector.load %arg3[%c0_4, %c0_5] : memref<1024x128xf32, #tpu.memory_space<vmem>>, vector<1024x128xf32>
    %cst_6 = arith.constant dense<0.000000e+00> : vector<4x128xf32>
    %17 = tpu.matmul %15, %16, %cst_6 {dimension_numbers = #tpu.dot_dimension_numbers<[1], [0], [0], [1], [0, 0, 1, 1], [], []>} : vector<4x1024xf32>, vector<1024x128xf32>, vector<4x128xf32> -> vector<4x128xf32>
    %c0_7 = arith.constant 0 : index
    %c0_8 = arith.constant 0 : index
    %18 = vector.load %arg4[%c0_7, %c0_8] : memref<1x128xf32, #tpu.memory_space<vmem>>, vector<1x128xf32>
    %19 = vector.broadcast %18 : vector<1x128xf32> to vector<4x128xf32>
    %20 = arith.addf %17, %19 : vector<4x128xf32>
    %cst_9 = arith.constant 0.000000e+00 : f32
    %21 = vector.broadcast %cst_9 : f32 to vector<4x128xf32>
    %22 = arith.maximumf %20, %21 : vector<4x128xf32>
    %c0_10 = arith.constant 0 : index
    %c0_11 = arith.constant 0 : index
    %23 = vector.load %arg5[%c0_10, %c0_11] : memref<4x128xf32, #tpu.memory_space<vmem>>, vector<4x128xf32>
    tpu.vector_store %arg5[%c0_10, %c0_11], %22 {strides = array<i32>} : memref<4x128xf32, #tpu.memory_space<vmem>>, vector<4x128xf32>,
    return
  }
  func.func @transform_0(%arg0: i32) -> i32 {
    %c0_i32 = arith.constant 0 : i32
    %c0_i32_0 = arith.constant 0 : i32
    return %c0_i32 : i32
  }
  func.func @transform_1(%arg0: i32) -> (i32, i32) {
    %c0_i32 = arith.constant 0 : i32
    %c0_i32_0 = arith.constant 0 : i32
    return %arg0, %c0_i32 : i32, i32
  }
  func.func @transform_2(%arg0: i32) -> (i32, i32) {
    %c0_i32 = arith.constant 0 : i32
    %c0_i32_0 = arith.constant 0 : i32
    %c0_i32_1 = arith.constant 0 : i32
    return %c0_i32, %c0_i32_0 : i32, i32
  }
  func.func @transform_3(%arg0: i32) -> (i32, i32) {
    %c0_i32 = arith.constant 0 : i32
    %c0_i32_0 = arith.constant 0 : i32
    %c0_i32_1 = arith.constant 0 : i32
    return %c0_i32, %c0_i32_0 : i32, i32
  }
  func.func @transform_4(%arg0: i32) -> (i32, i32) {
    %c0_i32 = arith.constant 0 : i32
    %c0_i32_0 = arith.constant 0 : i32
    return %arg0, %c0_i32 : i32, i32
  }
}

</mosaic_0001>

<llo_original>
// kernel: tpu_custom_call.1
$region0: #{tpu_custom_call.1}
  #allocation0 [shape = 'u32[]', space=smem, size = 0x4, offset = 0x4, fixed_abs, tag = 'smem constant byte address 0x4 - core index']
  #allocation1 [shape = 'u32[72,128]{1,0:T(1,128)}', space=vmem, size = 0x9000, scoped, tag = 'internal scratch']
  %s0 = inlined_call_operand.hbm [shape: f32[3], index: 0, kind: input, shape index: {}]
  %s1 = inlined_call_operand.hbm [shape: f32[4,3072], index: 1, kind: input, shape index: {}]
  %s2 = inlined_call_operand.hbm [shape: f32[1024,128], index: 2, kind: input, shape index: {}]
  %s3 = inlined_call_operand.vmem [shape: f32[1,128], index: 3, kind: input, shape index: {}]
  %s4 = inlined_call_operand.hbm [shape: f32[4,128], index: 4, kind: output, shape index: {}]
  %s5 = sld [smem:[#allocation0]]
  $region38: #{tpu_custom_call.1} parent=0
    _
  %s7 = ssub.s32 1, %s5
  %s8 = scalar_select 0, %s7, %s5
  $region1: #{tpu_custom_call.1} parent=0
    #allocation2 [shape = 'u8[512]{0}', space=smem, size = 0x200, scoped, tag = 'input window, operand 0, single buffered']
    #allocation3 [shape = 's32[1]{0}', space=sflag, size = 0x4, scoped, tag = 'scoped memory for tpu_custom_call.1']
    #allocation4 [shape = 's32[1]{0}', space=sflag, size = 0x4, scoped, tag = 'scoped memory for tpu_custom_call.1']
    #allocation5 [shape = 's32[1]{0}', space=sflag, size = 0x4, scoped, tag = 'scoped memory for tpu_custom_call.1']
    #allocation6 [shape = 'u8[49152]{0}', space=vmem, size = 0xc000, scoped, tag = 'input window, operand 1, single buffered']
    #allocation7 [shape = 'u8[524288]{0}', space=vmem, size = 0x80000, scoped, tag = 'input window, operand 2, single buffered']
    #allocation8 [shape = 's32[1]{0}', space=sflag, size = 0x4, scoped, tag = 'scoped memory for tpu_custom_call.1']
    #allocation9 [shape = 'u8[2048]{0}', space=vmem, size = 0x800, scoped, tag = 'output window, operand 0, single buffered']
    %9 = vsyncpa [#allocation5], 0
    %10 = vsyncpa [#allocation3], 0
    %11 = vsyncpa [#allocation8], 0
    %12 = vsyncpa [#allocation4], 0
    // Predicated region
    $region2: #{tpu_custom_call.1} parent=1 // pred_check
      _
    $region3: #{tpu_custom_call.1} parent=1 // pred_check_branch
      %14 = sbr.rel (0) target = $region5
    $region4: #{tpu_custom_call.1} parent=1 // pred_region
      %16 = vsyncadd [#allocation5], 0
      %s18 = sshll.u32 %s0, 4
      %s19 = int_to_ptr.hbm [resolvable:$true] %s18
      %21 = dma.hbm_to_smem %s19, 16, [#allocation2], [#allocation5]
    $region5: #{tpu_custom_call.1} parent=1 // pred_fallthru
      _
    // Predicated region
    $region6: #{tpu_custom_call.1} parent=1 // pred_check
      _
    $region7: #{tpu_custom_call.1} parent=1 // pred_check_branch
      %23 = sbr.rel (0) target = $region9
    $region8: #{tpu_custom_call.1} parent=1 // pred_region
      %25 = vsyncadd [#allocation3], 0
      %s27 = sshll.u32 %s1, 4
      %s28 = int_to_ptr.hbm [resolvable:$true] %s27
      %s29 = sshll.u32 [#allocation6], 4
      %s30 = int_to_ptr.vmem [resolvable:$true] %s29
      %32 = dma.hbm_to_vmem [thread:$0]  %s28, 1536, %s30, [#allocation3]
    $region9: #{tpu_custom_call.1} parent=1 // pred_fallthru
      _
    // Predicated region
    $region10: #{tpu_custom_call.1} parent=1 // pred_check
      _
    $region11: #{tpu_custom_call.1} parent=1 // pred_check_branch
      %34 = sbr.rel (0) target = $region13
    $region12: #{tpu_custom_call.1} parent=1 // pred_region
      %36 = vsyncadd [#allocation8], 0
      %s37 = sshll.u32 %s2, 4
      %s38 = int_to_ptr.hbm [resolvable:$true] %s37
      %s39 = sshll.u32 [#allocation7], 4
      %s40 = int_to_ptr.vmem [resolvable:$true] %s39
      %45 = dma.hbm_to_vmem [thread:$0]  %s38, 16384, %s40, [#allocation8], 128, 128, 8
    $region13: #{tpu_custom_call.1} parent=1 // pred_fallthru
      _
    // Predicated region
    $region14: #{tpu_custom_call.1} parent=1 // pred_check
      _
    $region15: #{tpu_custom_call.1} parent=1 // pred_check_branch
      %47 = sbr.rel (0) target = $region17
    $region16: #{tpu_custom_call.1} parent=1 // pred_region
      _
    $region17: #{tpu_custom_call.1} parent=1 // pred_fallthru
      _
    // Predicated region
    $region18: #{tpu_custom_call.1} parent=1 // pred_check
      _
    $region19: #{tpu_custom_call.1} parent=1 // pred_check_branch
      %49 = sbr.rel (0) target = $region21
    $region20: #{tpu_custom_call.1} parent=1 // pred_region
      %51 = dma.done [#allocation5], 16
    $region21: #{tpu_custom_call.1} parent=1 // pred_fallthru
      _
    // Predicated region
    $region22: #{tpu_custom_call.1} parent=1 // pred_check
      _
    $region23: #{tpu_custom_call.1} parent=1 // pred_check_branch
      %53 = sbr.rel (0) target = $region25
    $region24: #{tpu_custom_call.1} parent=1 // pred_region
      %55 = dma.done [#allocation3], 1536
    $region25: #{tpu_custom_call.1} parent=1 // pred_fallthru
      _
    // Predicated region
    $region26: #{tpu_custom_call.1} parent=1 // pred_check
      _
    $region27: #{tpu_custom_call.1} parent=1 // pred_check_branch
      %57 = sbr.rel (0) target = $region29
    $region28: #{tpu_custom_call.1} parent=1 // pred_region
      %59 = dma.done [#allocation8], 16384
    $region29: #{tpu_custom_call.1} parent=1 // pred_fallthru
      _
    %60 = sfence
    %s61 = sld [smem:[#allocation2]]
    %v62 = vld [vmem:[#allocation6] sm:$0xff]
    %v63 = vld [vmem:[#allocation6 + $0x8] sm:$0xff]
    %v64 = vld [vmem:[#allocation6 + $0x10] sm:$0xff]
    %v65 = vld [vmem:[#allocation6 + $0x18] sm:$0xff]
    %v66 = vstv %s61
    %v67 = vmul.f32 %v66, %v62
    %v68 = vmul.f32 %v66, %v63
    %v69 = vmul.f32 %v66, %v64
    %v70 = vmul.f32 %v66, %v65
    %s71 = sld [smem:[#allocation2 + $0x1]]
    %v72 = vld [vmem:[#allocation6 + $0x20] sm:$0xff]
    %v73 = vld [vmem:[#allocation6 + $0x28] sm:$0xff]
    %v74 = vld [vmem:[#allocation6 + $0x30] sm:$0xff]
    %v75 = vld [vmem:[#allocation6 + $0x38] sm:$0xff]
    %v76 = vstv %s71
    %v77 = vmul.f32 %v76, %v72
    %v78 = vmul.f32 %v76, %v73
    %v79 = vmul.f32 %v76, %v74
    %v80 = vmul.f32 %v76, %v75
    %v81 = vadd.f32 %v67, %v77
    %v82 = vadd.f32 %v68, %v78
    %v83 = vadd.f32 %v69, %v79
    %v84 = vadd.f32 %v70, %v80
    %s85 = sld [smem:[#allocation2 + $0x2]]
    %v86 = vld [vmem:[#allocation6 + $0x40] sm:$0xff]
    %v87 = vld [vmem:[#allocation6 + $0x48] sm:$0xff]
    %v88 = vld [vmem:[#allocation6 + $0x50] sm:$0xff]
    %v89 = vld [vmem:[#allocation6 + $0x58] sm:$0xff]
    %v90 = vstv %s85
    %v91 = vmul.f32 %v90, %v86
    %v92 = vmul.f32 %v90, %v87
    %v93 = vmul.f32 %v90, %v88
    %v94 = vmul.f32 %v90, %v89
    %v95 = vadd.f32 %v81, %v91
    %v96 = vadd.f32 %v82, %v92
    %v97 = vadd.f32 %v83, %v93
    %v98 = vadd.f32 %v84, %v94
    %v99 = vmax.f32 %v95, 0.0
    %v100 = vmax.f32 %v96, 0.0
    %v101 = vmax.f32 %v97, 0.0
    %v102 = vmax.f32 %v98, 0.0
    %v103 = vld [vmem:[#allocation7] sm:$0xff]
    %v104 = vld [vmem:[#allocation7 + $0x8] sm:$0xff]
    %v105 = vld [vmem:[#allocation7 + $0x10] sm:$0xff]
    %v106 = vld [vmem:[#allocation7 + $0x18] sm:$0xff]
    %v107 = vld [vmem:[#allocation7 + $0x20] sm:$0xff]
    %v108 = vld [vmem:[#allocation7 + $0x28] sm:$0xff]
    %v109 = vld [vmem:[#allocation7 + $0x30] sm:$0xff]
    %v110 = vld [vmem:[#allocation7 + $0x38] sm:$0xff]
    %v111 = vld [vmem:[#allocation7 + $0x40] sm:$0xff]
    %v112 = vld [vmem:[#allocation7 + $0x48] sm:$0xff]
    %v113 = vld [vmem:[#allocation7 + $0x50] sm:$0xff]
    %v114 = vld [vmem:[#allocation7 + $0x58] sm:$0xff]
    %v115 = vld [vmem:[#allocation7 + $0x60] sm:$0xff]
    %v116 = vld [vmem:[#allocation7 + $0x68] sm:$0xff]
    %v117 = vld [vmem:[#allocation7 + $0x70] sm:$0xff]
    %v118 = vld [vmem:[#allocation7 + $0x78] sm:$0xff]
    %v119 = vld [vmem:[#allocation7 + $0x80] sm:$0xff]
    %v120 = vld [vmem:[#allocation7 + $0x88] sm:$0xff]
    %v121 = vld [vmem:[#allocation7 + $0x90] sm:$0xff]
    %v122 = vld [vmem:[#allocation7 + $0x98] sm:$0xff]
    %v123 = vld [vmem:[#allocation7 + $0xa0] sm:$0xff]
    %v124 = vld [vmem:[#allocation7 + $0xa8] sm:$0xff]
    %v125 = vld [vmem:[#allocation7 + $0xb0] sm:$0xff]
    %v126 = vld [vmem:[#allocation7 + $0xb8] sm:$0xff]
    %v127 = vld [vmem:[#allocation7 + $0xc0] sm:$0xff]
    %v128 = vld [vmem:[#allocation7 + $0xc8] sm:$0xff]
    %v129 = vld [vmem:[#allocation7 + $0xd0] sm:$0xff]
    %v130 = vld [vmem:[#allocation7 + $0xd8] sm:$0xff]
    %v131 = vld [vmem:[#allocation7 + $0xe0] sm:$0xff]
    %v132 = vld [vmem:[#allocation7 + $0xe8] sm:$0xff]
    %v133 = vld [vmem:[#allocation7 + $0xf0] sm:$0xff]
    %v134 = vld [vmem:[#allocation7 + $0xf8] sm:$0xff]
    %v135 = vld [vmem:[#allocation7 + $0x100] sm:$0xff]
    %v136 = vld [vmem:[#allocation7 + $0x108] sm:$0xff]
    %v137 = vld [vmem:[#allocation7 + $0x110] sm:$0xff]
    %v138 = vld [vmem:[#allocation7 + $0x118] sm:$0xff]
    %v139 = vld [vmem:[#allocation7 + $0x120] sm:$0xff]
    %v140 = vld [vmem:[#allocation7 + $0x128] sm:$0xff]
    %v141 = vld [vmem:[#allocation7 + $0x130] sm:$0xff]
    %v142 = vld [vmem:[#allocation7 + $0x138] sm:$0xff]
    %v143 = vld [vmem:[#allocation7 + $0x140] sm:$0xff]
    %v144 = vld [vmem:[#allocation7 + $0x148] sm:$0xff]
    %v145 = vld [vmem:[#allocation7 + $0x150] sm:$0xff]
    %v146 = vld [vmem:[#allocation7 + $0x158] sm:$0xff]
    %v147 = vld [vmem:[#allocation7 + $0x160] sm:$0xff]
    %v148 = vld [vmem:[#allocation7 + $0x168] sm:$0xff]
    %v149 = vld [vmem:[#allocation7 + $0x170] sm:$0xff]
    %v150 = vld [vmem:[#allocation7 + $0x178] sm:$0xff]
    %v151 = vld [vmem:[#allocation7 + $0x180] sm:$0xff]
    %v152 = vld [vmem:[#allocation7 + $0x188] sm:$0xff]
    %v153 = vld [vmem:[#allocation7 + $0x190] sm:$0xff]
    %v154 = vld [vmem:[#allocation7 + $0x198] sm:$0xff]
    %v155 = vld [vmem:[#allocation7 + $0x1a0] sm:$0xff]
    %v156 = vld [vmem:[#allocation7 + $0x1a8] sm:$0xff]
    %v157 = vld [vmem:[#allocation7 + $0x1b0] sm:$0xff]
    %v158 = vld [vmem:[#allocation7 + $0x1b8] sm:$0xff]
    %v159 = vld [vmem:[#allocation7 + $0x1c0] sm:$0xff]
    %v160 = vld [vmem:[#allocation7 + $0x1c8] sm:$0xff]
    %v161 = vld [vmem:[#allocation7 + $0x1d0] sm:$0xff]
    %v162 = vld [vmem:[#allocation7 + $0x1d8] sm:$0xff]
    %v163 = vld [vmem:[#allocation7 + $0x1e0] sm:$0xff]
    %v164 = vld [vmem:[#allocation7 + $0x1e8] sm:$0xff]
    %v165 = vld [vmem:[#allocation7 + $0x1f0] sm:$0xff]
    %v166 = vld [vmem:[#allocation7 + $0x1f8] sm:$0xff]
    %v167 = vld [vmem:[#allocation7 + $0x200] sm:$0xff]
    %v168 = vld [vmem:[#allocation7 + $0x208] sm:$0xff]
    %v169 = vld [vmem:[#allocation7 + $0x210] sm:$0xff]
    %v170 = vld [vmem:[#allocation7 + $0x218] sm:$0xff]
    %v171 = vld [vmem:[#allocation7 + $0x220] sm:$0xff]
    %v172 = vld [vmem:[#allocation7 + $0x228] sm:$0xff]
    %v173 = vld [vmem:[#allocation7 + $0x230] sm:$0xff]
    %v174 = vld [vmem:[#allocation7 + $0x238] sm:$0xff]
    %v175 = vld [vmem:[#allocation7 + $0x240] sm:$0xff]
    %v176 = vld [vmem:[#allocation7 + $0x248] sm:$0xff]
    %v177 = vld [vmem:[#allocation7 + $0x250] sm:$0xff]
    %v178 = vld [vmem:[#allocation7 + $0x258] sm:$0xff]
    %v179 = vld [vmem:[#allocation7 + $0x260] sm:$0xff]
    %v180 = vld [vmem:[#allocation7 + $0x268] sm:$0xff]
    %v181 = vld [vmem:[#allocation7 + $0x270] sm:$0xff]
    %v182 = vld [vmem:[#allocation7 + $0x278] sm:$0xff]
    %v183 = vld [vmem:[#allocation7 + $0x280] sm:$0xff]
    %v184 = vld [vmem:[#allocation7 + $0x288] sm:$0xff]
    %v185 = vld [vmem:[#allocation7 + $0x290] sm:$0xff]
    %v186 = vld [vmem:[#allocation7 + $0x298] sm:$0xff]
    %v187 = vld [vmem:[#allocation7 + $0x2a0] sm:$0xff]
    %v188 = vld [vmem:[#allocation7 + $0x2a8] sm:$0xff]
    %v189 = vld [vmem:[#allocation7 + $0x2b0] sm:$0xff]
    %v190 = vld [vmem:[#allocation7 + $0x2b8] sm:$0xff]
    %v191 = vld [vmem:[#allocation7 + $0x2c0] sm:$0xff]
    %v192 = vld [vmem:[#allocation7 + $0x2c8] sm:$0xff]
    %v193 = vld [vmem:[#allocation7 + $0x2d0] sm:$0xff]
    %v194 = vld [vmem:[#allocation7 + $0x2d8] sm:$0xff]
    %v195 = vld [vmem:[#allocation7 + $0x2e0] sm:$0xff]
    %v196 = vld [vmem:[#allocation7 + $0x2e8] sm:$0xff]
    %v197 = vld [vmem:[#allocation7 + $0x2f0] sm:$0xff]
    %v198 = vld [vmem:[#allocation7 + $0x2f8] sm:$0xff]
    %v199 = vld [vmem:[#allocation7 + $0x300] sm:$0xff]
    %v200 = vld [vmem:[#allocation7 + $0x308] sm:$0xff]
    %v201 = vld [vmem:[#allocation7 + $0x310] sm:$0xff]
    %v202 = vld [vmem:[#allocation7 + $0x318] sm:$0xff]
    %v203 = vld [vmem:[#allocation7 + $0x320] sm:$0xff]
    %v204 = vld [vmem:[#allocation7 + $0x328] sm:$0xff]
    %v205 = vld [vmem:[#allocation7 + $0x330] sm:$0xff]
    %v206 = vld [vmem:[#allocation7 + $0x338] sm:$0xff]
    %v207 = vld [vmem:[#allocation7 + $0x340] sm:$0xff]
    %v208 = vld [vmem:[#allocation7 + $0x348] sm:$0xff]
    %v209 = vld [vmem:[#allocation7 + $0x350] sm:$0xff]
    %v210 = vld [vmem:[#allocation7 + $0x358] sm:$0xff]
    %v211 = vld [vmem:[#allocation7 + $0x360] sm:$0xff]
    %v212 = vld [vmem:[#allocation7 + $0x368] sm:$0xff]
    %v213 = vld [vmem:[#allocation7 + $0x370] sm:$0xff]
    %v214 = vld [vmem:[#allocation7 + $0x378] sm:$0xff]
    %v215 = vld [vmem:[#allocation7 + $0x380] sm:$0xff]
    %v216 = vld [vmem:[#allocation7 + $0x388] sm:$0xff]
    %v217 = vld [vmem:[#allocation7 + $0x390] sm:$0xff]
    %v218 = vld [vmem:[#allocation7 + $0x398] sm:$0xff]
    %v219 = vld [vmem:[#allocation7 + $0x3a0] sm:$0xff]
    %v220 = vld [vmem:[#allocation7 + $0x3a8] sm:$0xff]
    %v221 = vld [vmem:[#allocation7 + $0x3b0] sm:$0xff]
    %v222 = vld [vmem:[#allocation7 + $0x3b8] sm:$0xff]
    %v223 = vld [vmem:[#allocation7 + $0x3c0] sm:$0xff]
    %v224 = vld [vmem:[#allocation7 + $0x3c8] sm:$0xff]
    %v225 = vld [vmem:[#allocation7 + $0x3d0] sm:$0xff]
    %v226 = vld [vmem:[#allocation7 + $0x3d8] sm:$0xff]
    %v227 = vld [vmem:[#allocation7 + $0x3e0] sm:$0xff]
    %v228 = vld [vmem:[#allocation7 + $0x3e8] sm:$0xff]
    %v229 = vld [vmem:[#allocation7 + $0x3f0] sm:$0xff]
    %v230 = vld [vmem:[#allocation7 + $0x3f8] sm:$0xff]
    %v231 = vld [vmem:[%s3] sm:$0x1]
    %v233 = vperm.slane %v231, 0
    %239 = vst [vmem:[#allocation1] ss:$2 sm:$0xff] %v99
    %s240 = scalar_lea.vmem [#allocation1], 16
    %241 = vst [vmem:[%s240] ss:$2 sm:$0xff] %v100
    %s242 = scalar_lea.vmem [#allocation1], 32
    %243 = vst [vmem:[%s242] ss:$2 sm:$0xff] %v101
    %s244 = scalar_lea.vmem [#allocation1], 48
    %245 = vst [vmem:[%s244] ss:$2 sm:$0xff] %v102
    %v246 = vld.sshfl [vmem:[#allocation1] sm:$0xff pattern:$0x75316420]
    %v247 = vld.sshfl [vmem:[#allocation1 + $0x8] sm:$0xff pattern:$0x75316420]
    %v248 = vld.sshfl [vmem:[#allocation1 + $0x10] sm:$0xff pattern:$0x75316420]
    %v249 = vld.sshfl [vmem:[#allocation1 + $0x18] sm:$0xff pattern:$0x75316420]
    %v250 = vld.sshfl [vmem:[#allocation1 + $0x20] sm:$0xff pattern:$0x75316420]
    %v251 = vld.sshfl [vmem:[#allocation1 + $0x28] sm:$0xff pattern:$0x75316420]
    %v252 = vld.sshfl [vmem:[#allocation1 + $0x30] sm:$0xff pattern:$0x75316420]
    %v253 = vld.sshfl [vmem:[#allocation1 + $0x38] sm:$0xff pattern:$0x75316420]
    %262 = vmatpush.msra.mxu0 %v118
    %263 = vmatpush.msra.mxu0 %v117
    %264 = vmatpush.msra.mxu0 %v116
    %265 = vmatpush.msra.mxu0 %v115
    %266 = vmatpush.msra.mxu0 %v114
    %267 = vmatpush.msra.mxu0 %v113
    %268 = vmatpush.msra.mxu0 %v112
    %269 = vmatpush.msra.mxu0 %v111
    %270 = vmatpush.msra.mxu0 %v110
    %271 = vmatpush.msra.mxu0 %v109
    %272 = vmatpush.msra.mxu0 %v108
    %273 = vmatpush.msra.mxu0 %v107
    %274 = vmatpush.msra.mxu0 %v106
    %275 = vmatpush.msra.mxu0 %v105
    %276 = vmatpush.msra.mxu0 %v104
    %277 = vmatpush.msra.mxu0 %v103
    %278 = vmatmul.f32.gmra.mxu0 %v246
    %v279 = vpop.f32.mrf.mxu0
    %v280 = vadd.f32 %v233, %v279
    %281 = vdwg.mxu0
    %282 = vmatpush.msra.mxu0 %v134
    %283 = vmatpush.msra.mxu0 %v133
    %284 = vmatpush.msra.mxu0 %v132
    %285 = vmatpush.msra.mxu0 %v131
    %286 = vmatpush.msra.mxu0 %v130
    %287 = vmatpush.msra.mxu0 %v129
    %288 = vmatpush.msra.mxu0 %v128
    %289 = vmatpush.msra.mxu0 %v127
    %290 = vmatpush.msra.mxu0 %v126
    %291 = vmatpush.msra.mxu0 %v125
    %292 = vmatpush.msra.mxu0 %v124
    %293 = vmatpush.msra.mxu0 %v123
    %294 = vmatpush.msra.mxu0 %v122
    %295 = vmatpush.msra.mxu0 %v121
    %296 = vmatpush.msra.mxu0 %v120
    %297 = vmatpush.msra.mxu0 %v119
    %298 = vmatmul.f32.gmra.mxu0 %v247
    %v299 = vpop.f32.mrf.mxu0
    %v300 = vadd.f32 %v280, %v299
    %301 = vdwg.mxu0
    %302 = vmatpush.msra.mxu0 %v150
    %303 = vmatpush.msra.mxu0 %v149
    %304 = vmatpush.msra.mxu0 %v148
    %305 = vmatpush.msra.mxu0 %v147
    %306 = vmatpush.msra.mxu0 %v146
    %307 = vmatpush.msra.mxu0 %v145
    %308 = vmatpush.msra.mxu0 %v144
    %309 = vmatpush.msra.mxu0 %v143
    %310 = vmatpush.msra.mxu0 %v142
    %311 = vmatpush.msra.mxu0 %v141
    %312 = vmatpush.msra.mxu0 %v140
    %313 = vmatpush.msra.mxu0 %v139
    %314 = vmatpush.msra.mxu0 %v138
    %315 = vmatpush.msra.mxu0 %v137
    %316 = vmatpush.msra.mxu0 %v136
    %317 = vmatpush.msra.mxu0 %v135
    %318 = vmatmul.f32.gmra.mxu0 %v248
    %v319 = vpop.f32.mrf.mxu0
    %v320 = vadd.f32 %v300, %v319
    %321 = vdwg.mxu0
    %322 = vmatpush.msra.mxu0 %v166
    %323 = vmatpush.msra.mxu0 %v165
    %324 = vmatpush.msra.mxu0 %v164
    %325 = vmatpush.msra.mxu0 %v163
    %326 = vmatpush.msra.mxu0 %v162
    %327 = vmatpush.msra.mxu0 %v161
    %328 = vmatpush.msra.mxu0 %v160
    %329 = vmatpush.msra.mxu0 %v159
    %330 = vmatpush.msra.mxu0 %v158
    %331 = vmatpush.msra.mxu0 %v157
    %332 = vmatpush.msra.mxu0 %v156
    %333 = vmatpush.msra.mxu0 %v155
    %334 = vmatpush.msra.mxu0 %v154
    %335 = vmatpush.msra.mxu0 %v153
    %336 = vmatpush.msra.mxu0 %v152
    %337 = vmatpush.msra.mxu0 %v151
    %338 = vmatmul.f32.gmra.mxu0 %v249
    %v339 = vpop.f32.mrf.mxu0
    %v340 = vadd.f32 %v320, %v339
    %341 = vdwg.mxu0
    %342 = vmatpush.msra.mxu0 %v182
    %343 = vmatpush.msra.mxu0 %v181
    %344 = vmatpush.msra.mxu0 %v180
    %345 = vmatpush.msra.mxu0 %v179
    %346 = vmatpush.msra.mxu0 %v178
    %347 = vmatpush.msra.mxu0 %v177
    %348 = vmatpush.msra.mxu0 %v176
    %349 = vmatpush.msra.mxu0 %v175
    %350 = vmatpush.msra.mxu0 %v174
    %351 = vmatpush.msra.mxu0 %v173
    %352 = vmatpush.msra.mxu0 %v172
    %353 = vmatpush.msra.mxu0 %v171
    %354 = vmatpush.msra.mxu0 %v170
    %355 = vmatpush.msra.mxu0 %v169
    %356 = vmatpush.msra.mxu0 %v168
    %357 = vmatpush.msra.mxu0 %v167
    %358 = vmatmul.f32.gmra.mxu0 %v250
    %v359 = vpop.f32.mrf.mxu0
    %v360 = vadd.f32 %v340, %v359
    %361 = vdwg.mxu0
    %362 = vmatpush.msra.mxu0 %v198
    %363 = vmatpush.msra.mxu0 %v197
    %364 = vmatpush.msra.mxu0 %v196
    %365 = vmatpush.msra.mxu0 %v195
    %366 = vmatpush.msra.mxu0 %v194
    %367 = vmatpush.msra.mxu0 %v193
    %368 = vmatpush.msra.mxu0 %v192
    %369 = vmatpush.msra.mxu0 %v191
    %370 = vmatpush.msra.mxu0 %v190
    %371 = vmatpush.msra.mxu0 %v189
    %372 = vmatpush.msra.mxu0 %v188
    %373 = vmatpush.msra.mxu0 %v187
    %374 = vmatpush.msra.mxu0 %v186
    %375 = vmatpush.msra.mxu0 %v185
    %376 = vmatpush.msra.mxu0 %v184
    %377 = vmatpush.msra.mxu0 %v183
    %378 = vmatmul.f32.gmra.mxu0 %v251
    %v379 = vpop.f32.mrf.mxu0
    %v380 = vadd.f32 %v360, %v379
    %381 = vdwg.mxu0
    %382 = vmatpush.msra.mxu0 %v214
    %383 = vmatpush.msra.mxu0 %v213
    %384 = vmatpush.msra.mxu0 %v212
    %385 = vmatpush.msra.mxu0 %v211
    %386 = vmatpush.msra.mxu0 %v210
    %387 = vmatpush.msra.mxu0 %v209
    %388 = vmatpush.msra.mxu0 %v208
    %389 = vmatpush.msra.mxu0 %v207
    %390 = vmatpush.msra.mxu0 %v206
    %391 = vmatpush.msra.mxu0 %v205
    %392 = vmatpush.msra.mxu0 %v204
    %393 = vmatpush.msra.mxu0 %v203
    %394 = vmatpush.msra.mxu0 %v202
    %395 = vmatpush.msra.mxu0 %v201
    %396 = vmatpush.msra.mxu0 %v200
    %397 = vmatpush.msra.mxu0 %v199
    %398 = vmatmul.f32.gmra.mxu0 %v252
    %v399 = vpop.f32.mrf.mxu0
    %v400 = vadd.f32 %v380, %v399
    %401 = vdwg.mxu0
    %402 = vmatpush.msra.mxu0 %v230
    %403 = vmatpush.msra.mxu0 %v229
    %404 = vmatpush.msra.mxu0 %v228
    %405 = vmatpush.msra.mxu0 %v227
    %406 = vmatpush.msra.mxu0 %v226
    %407 = vmatpush.msra.mxu0 %v225
    %408 = vmatpush.msra.mxu0 %v224
    %409 = vmatpush.msra.mxu0 %v223
    %410 = vmatpush.msra.mxu0 %v222
    %411 = vmatpush.msra.mxu0 %v221
    %412 = vmatpush.msra.mxu0 %v220
    %413 = vmatpush.msra.mxu0 %v219
    %414 = vmatpush.msra.mxu0 %v218
    %415 = vmatpush.msra.mxu0 %v217
    %416 = vmatpush.msra.mxu0 %v216
    %417 = vmatpush.msra.mxu0 %v215
    %418 = vmatmul.f32.gmra.mxu0 %v253
    %v419 = vpop.f32.mrf.mxu0
    %v420 = vadd.f32 %v400, %v419
    %421 = vdwg.mxu0
    %v422 = vmax.f32 %v420, 0.0
    %423 = vst [vmem:[#allocation9] sm:$0xf] %v422
    // Predicated region
    $region30: #{tpu_custom_call.1} parent=1 // pred_check
      _
    $region31: #{tpu_custom_call.1} parent=1 // pred_check_branch
      %425 = sbr.rel (0) target = $region33
    $region32: #{tpu_custom_call.1} parent=1 // pred_region
      %427 = vsyncadd [#allocation4], 0
      %s429 = sshll.u32 [#allocation9], 4
      %s430 = int_to_ptr.vmem [resolvable:$true] %s429
      %s431 = sshll.u32 %s4, 4
      %s432 = int_to_ptr.hbm [resolvable:$true] %s431
      %434 = dma.vmem_to_hbm [thread:$0]  %s430, 64, %s432, [#allocation4]
    $region33: #{tpu_custom_call.1} parent=1 // pred_fallthru
      _
    // Predicated region
    $region34: #{tpu_custom_call.1} parent=1 // pred_check
      _
    $region35: #{tpu_custom_call.1} parent=1 // pred_check_branch
      %436 = sbr.rel (0) target = $region37
    $region36: #{tpu_custom_call.1} parent=1 // pred_region
      %438 = dma.done [#allocation4], 64
    $region37: #{tpu_custom_call.1} parent=1 // pred_fallthru
      _
    %439 = vsyncpa [#allocation3], 1
    %440 = vsyncpa [#allocation8], 1
    %441 = vsyncpa [#allocation4], 1
    %442 = vsyncpa [#allocation5], 1

</llo_original>
